<compile_context>
chip_gen: v7x
topology: tpu7x:2x2x1
jax: 0.10.0
libtpu: 0.0.40
codegen_flags: <defaults>
</compile_context>

<pallas_src>
import functools

import jax
import jax.numpy as jnp
import numpy as np
from jax.experimental import pallas as pl
from jax.experimental.pallas import tpu as pltpu


NCOL = 128  # lane-dense padded feature width (>= max hidden size, multiple of 128)


def _round_up(x, m):
    return ((x + m - 1) // m) * m


def _gcn_layer_kernel(l_ref, b_ref, o_ref, acc_ref, *, tk, apply_relu, apply_rownorm):
    """One row-tile x K-tile step of  out_tile = epilogue( L_rowpanel @ B )."""
    k = pl.program_id(1)

    @pl.when(k == 0)
    def _():
        acc_ref[...] = jnp.zeros_like(acc_ref)

    # B is fully VMEM-resident; slice the K-block matching this L tile.
    k0 = pl.multiple_of(k * tk, tk)
    acc_ref[...] += jnp.dot(
        l_ref[...], b_ref[pl.ds(k0, tk), :], preferred_element_type=jnp.float32
    )

    @pl.when(k == pl.num_programs(1) - 1)
    def _():
        h = acc_ref[...]
        if apply_relu:
            h = jnp.maximum(h, 0.0)
        if apply_rownorm:
            # rownorm with eps clamp: h / max(||h||, 1e-7) == h * rsqrt(max(sumsq, 1e-14))
            ssq = jnp.sum(h * h, axis=1, keepdims=True)
            h = h * jax.lax.rsqrt(jnp.maximum(ssq, 1e-14))
        o_ref[...] = h.astype(o_ref.dtype)


def _gcn_layer(L_pad, B_pad, *, tm, tk, apply_relu, apply_rownorm):
    """out = epilogue(L_pad @ B_pad), tiled over rows (parallel) and K (arbitrary)."""
    n_pad = L_pad.shape[0]
    ncol = B_pad.shape[1]
    grid = (n_pad // tm, n_pad // tk)

    kernel = functools.partial(
        _gcn_layer_kernel, tk=tk, apply_relu=apply_relu, apply_rownorm=apply_rownorm
    )

    itemsize = jnp.dtype(L_pad.dtype).itemsize
    # Budget: double-buffered L tile + (conservatively double-buffered) resident B
    #         + f32 accumulator + double-buffered output block + slack.
    vmem_bytes = (
        2 * tm * tk * itemsize
        + 2 * n_pad * ncol * jnp.dtype(B_pad.dtype).itemsize
        + tm * ncol * 4
        + 2 * tm * ncol * 4
        + (4 << 20)
    )
    # Floor above the v5e 16 MiB scoped default; cap below v7x's 64 MiB physical VMEM.
    vmem_bytes = int(min(max(vmem_bytes, 32 << 20), 64 << 20))

    cost = pl.CostEstimate(
        flops=2 * n_pad * n_pad * ncol,
        transcendentals=n_pad if apply_rownorm else 0,
        bytes_accessed=n_pad * n_pad * itemsize + n_pad * ncol * (itemsize + 4),
    )

    return pl.pallas_call(
        kernel,
        out_shape=jax.ShapeDtypeStruct((n_pad, ncol), jnp.float32),
        grid_spec=pltpu.PrefetchScalarGridSpec(
            num_scalar_prefetch=0,
            grid=grid,
            in_specs=[
                # L: streamed (tm, tk) tiles, double-buffered by the Pallas pipeline.
                pl.BlockSpec((tm, tk), lambda i, k: (i, k)),
                # B: full array, constant block index -> resident in VMEM, fetched once.
                pl.BlockSpec((n_pad, ncol), lambda i, k: (0, 0)),
            ],
            out_specs=pl.BlockSpec((tm, ncol), lambda i, k: (i, 0)),
            scratch_shapes=[pltpu.VMEM((tm, ncol), jnp.float32)],
        ),
        compiler_params=pltpu.CompilerParams(
            dimension_semantics=("parallel", "arbitrary"),
            vmem_limit_bytes=vmem_bytes,
        ),
        cost_estimate=cost,
    )(L_pad, B_pad)


def egae_forward(L, X, W0, W1, *, matmul_dtype=jnp.float32, tm_hint=256, tk_hint=512):
    """EGAE forward. matmul_dtype=jnp.bfloat16 halves the dominant L byte stream
    (MXU operands only; accumulation and epilogue stay f32)."""
    n, _ = X.shape
    h1 = W0.shape[1]
    h2 = W1.shape[1]
    assert h1 <= NCOL and h2 <= NCOL

    # --- padded node count + tile sizes (tiles must divide n_pad; last dims 128-aligned) ---
    # TODO(synk): padding to a 512 multiple is simple but wasteful for small n; a masked
    # edge-tile variant would avoid the (n_pad/n)^2 extra L bytes.
    n_pad = _round_up(n, 512) if n > 256 else _round_up(n, 128)
    tk = min(tk_hint, n_pad)
    tm = min(tm_hint, n_pad)

    L = L.astype(jnp.float32)
    X = X.astype(jnp.float32)
    W0 = W0.astype(jnp.float32)
    W1 = W1.astype(jnp.float32)

    # Tiny dense matmuls (n x <=50 x <=32) stay in plain XLA; HIGHEST precision so the
    # host-side reference comparison is meaningful.
    xw0 = jnp.dot(X, W0, precision=jax.lax.Precision.HIGHEST)  # (n, h1)

    L_pad = jnp.pad(L, ((0, n_pad - n), (0, n_pad - n))).astype(matmul_dtype)
    b1 = jnp.pad(xw0, ((0, n_pad - n), (0, NCOL - h1)))  # (n_pad, 128), zero-padded lanes

    # --- pass 1: H1 = relu(L @ (X W0)) ---
    h1_pad = _gcn_layer(
        L_pad, b1.astype(matmul_dtype), tm=tm, tk=tk, apply_relu=True, apply_rownorm=False
    )  # (n_pad, 128) f32; columns >= h1 are exactly zero

    # --- pass 2: out = rownorm(L @ (H1 W1)) ---
    w1_pad = jnp.zeros((NCOL, NCOL), jnp.float32).at[:h1, :h2].set(W1)
    b2 = jnp.dot(h1_pad, w1_pad, precision=jax.lax.Precision.HIGHEST)  # (n_pad, 128)
    out_pad = _gcn_layer(
        L_pad, b2.astype(matmul_dtype), tm=tm, tk=tk, apply_relu=False, apply_rownorm=True
    )
    return out_pad[:n, :h2]


# ---------------------------------------------------------------------------
# Helpers reproducing the torch-side setup (Laplacian construction, weight init)
# ---------------------------------------------------------------------------
def build_laplacian(A):
    """Dense equivalent of get_Laplacian: sqrt(D)^-1 (A - diag(A) + I) sqrt(D)^-1."""
    n = A.shape[0]
    L = A - jnp.diag(jnp.diag(A)) + jnp.eye(n, dtype=A.dtype)
    D = jnp.sum(L, axis=1)
    sqrt_D_inv = jnp.power(D, -0.5)
    return (sqrt_D_inv[:, None] * L) * sqrt_D_inv[None, :]


def get_weight_initial(key, shape):
    """Matches torch get_weight_initial: uniform(-b, b), b = sqrt(6/(fan_in+fan_out))."""
    bound = np.sqrt(6.0 / (shape[0] + shape[1]))
    return jax.random.uniform(key, shape, dtype=jnp.float32, minval=-bound, maxval=bound)


if __name__ == "__main__":
    # Small graph consistent with the module: n nodes, d input features, layers [32, 16].
    # n=600 pads to 1024 -> grid (4, 2): exercises row tiling, K reduction and padding.
    n, d = 600, 50
    layers = [32, 16]

    key = jax.random.PRNGKey(0)
    k_adj, k_x, k_w0, k_w1 = jax.random.split(key, 4)

    # Deterministic synthetic symmetric binary adjacency (self-loops added by the Laplacian).
    A_upper = (jax.random.uniform(k_adj, (n, n)) > 0.95).astype(jnp.float32)
    A = jnp.triu(A_upper, 1)
    A = A + A.T

    X = jax.random.normal(k_x, (n, d), dtype=jnp.float32)
    W0 = get_weight_initial(k_w0, (d, layers[0]))
    W1 = get_weight_initial(k_w1, (layers[0], layers[1]))

    Lap = build_laplacian(A).astype(jnp.float32)

    # f32 path: exact module semantics.
    out_f32 = jax.block_until_ready(
        egae_forward(Lap, X, W0, W1, matmul_dtype=jnp.float32)
    )
    # bf16 MXU-operand path (mem-bound optimization for v6e/v7x), f32 accumulation.
    out_bf16 = jax.block_until_ready(
        egae_forward(Lap, X, W0, W1, matmul_dtype=jnp.bfloat16)
    )

    # Reference (torch semantics) in float64 numpy.
    L_np = np.asarray(Lap, dtype=np.float64)
    X_np = np.asarray(X, dtype=np.float64)
    W0_np = np.asarray(W0, dtype=np.float64)
    W1_np = np.asarray(W1, dtype=np.float64)
    H = np.maximum(L_np @ (X_np @ W0_np), 0.0)
    H = L_np @ (H @ W1_np)
    nrm = np.maximum(np.linalg.norm(H, axis=1, keepdims=True), 1e-7)
    ref = H / nrm

    np.testing.assert_allclose(np.asarray(out_f32, np.float64), ref, rtol=1e-4, atol=1e-4)
    # Mixed-precision (bf16 operands, f32 accumulation) checked at a looser tolerance.
    np.testing.assert_allclose(np.asarray(out_bf16, np.float64), ref, rtol=5e-2, atol=5e-2)

    print("KERNEL_OK")
</pallas_src>

<mosaic_0001>
module attributes {stable_mosaic.version = 11 : i64} {
  func.func @_gcn_layer_kernel(%arg0: i32, %arg1: i32, %arg2: memref<256x512xf32, #tpu.memory_space<vmem>>, %arg3: memref<1024x128xf32, #tpu.memory_space<vmem>>, %arg4: memref<256x128xf32, #tpu.memory_space<vmem>>, %arg5: memref<256x128xf32, #tpu.memory_space<vmem>>) attributes {dimension_semantics = [#tpu.dimension_semantics<parallel>, #tpu.dimension_semantics<arbitrary>], iteration_bounds = array<i64: 4, 2>, scalar_prefetch = 0 : i64, scratch_operands = 1 : i64, tpu.core_type = #tpu.core_type<tc>, window_params = [{transform_indices = @transform_0, window_bounds = array<i64: 256, 512>}, {pipeline_mode = #tpu.pipeline_mode<synchronous>, transform_indices = @transform_1, window_bounds = array<i64: 1024, 128>}, {transform_indices = @transform_2, window_bounds = array<i64: 256, 128>}]} {
    %c0_i32 = arith.constant 0 : i32
    %0 = arith.cmpi eq, %arg1, %c0_i32 : i32
    %1 = arith.extui %0 : i1 to i32
    %c0_i32_0 = arith.constant 0 : i32
    %2 = arith.cmpi ne, %1, %c0_i32_0 : i32
    scf.if %2 {
      %cst_8 = arith.constant 0.000000e+00 : f32
      %15 = vector.broadcast %cst_8 : f32 to vector<256x128xf32>
      %c0_9 = arith.constant 0 : index
      %c0_10 = arith.constant 0 : index
      %16 = vector.load %arg5[%c0_9, %c0_10] : memref<256x128xf32, #tpu.memory_space<vmem>>, vector<256x128xf32>
      tpu.vector_store %arg5[%c0_9, %c0_10], %15 {strides = array<i32>} : memref<256x128xf32, #tpu.memory_space<vmem>>, vector<256x128xf32>,
    } else {
    }
    %c512_i32 = arith.constant 512 : i32
    %3 = arith.muli %arg1, %c512_i32 : i32
    %4 = tpu.assume_multiple %3, 512 : i32
    %c0 = arith.constant 0 : index
    %c0_1 = arith.constant 0 : index
    %5 = vector.load %arg5[%c0, %c0_1] : memref<256x128xf32, #tpu.memory_space<vmem>>, vector<256x128xf32>
    %c0_2 = arith.constant 0 : index
    %c0_3 = arith.constant 0 : index
    %6 = vector.load %arg2[%c0_2, %c0_3] : memref<256x512xf32, #tpu.memory_space<vmem>>, vector<256x512xf32>
    %7 = arith.index_cast %4 : i32 to index
    %c0_4 = arith.constant 0 : index
    %8 = vector.load %arg3[%7, %c0_4] : memref<1024x128xf32, #tpu.memory_space<vmem>>, vector<512x128xf32>
    %cst = arith.constant dense<0.000000e+00> : vector<256x128xf32>
    %9 = tpu.matmul %6, %8, %cst {dimension_numbers = #tpu.dot_dimension_numbers<[1], [0], [0], [1], [0, 0, 1, 1], [], []>} : vector<256x512xf32>, vector<512x128xf32>, vector<256x128xf32> -> vector<256x128xf32>
    %10 = arith.addf %5, %9 : vector<256x128xf32>
    %c0_5 = arith.constant 0 : index
    %c0_6 = arith.constant 0 : index
    %11 = vector.load %arg5[%c0_5, %c0_6] : memref<256x128xf32, #tpu.memory_space<vmem>>, vector<256x128xf32>
    tpu.vector_store %arg5[%c0_5, %c0_6], %10 {strides = array<i32>} : memref<256x128xf32, #tpu.memory_space<vmem>>, vector<256x128xf32>,
    %c1_i32 = arith.constant 1 : i32
    %12 = arith.cmpi eq, %arg1, %c1_i32 : i32
    %13 = arith.extui %12 : i1 to i32
    %c0_i32_7 = arith.constant 0 : i32
    %14 = arith.cmpi ne, %13, %c0_i32_7 : i32
    scf.if %14 {
      %c0_8 = arith.constant 0 : index
      %c0_9 = arith.constant 0 : index
      %15 = vector.load %arg5[%c0_8, %c0_9] : memref<256x128xf32, #tpu.memory_space<vmem>>, vector<256x128xf32>
      %cst_10 = arith.constant 0.000000e+00 : f32
      %16 = vector.broadcast %cst_10 : f32 to vector<256x128xf32>
      %17 = arith.maximumf %15, %16 : vector<256x128xf32>
      %c0_11 = arith.constant 0 : index
      %c0_12 = arith.constant 0 : index
      %18 = vector.load %arg4[%c0_11, %c0_12] : memref<256x128xf32, #tpu.memory_space<vmem>>, vector<256x128xf32>
      tpu.vector_store %arg4[%c0_11, %c0_12], %17 {strides = array<i32>} : memref<256x128xf32, #tpu.memory_space<vmem>>, vector<256x128xf32>,
    } else {
    }
    return
  }
  func.func @transform_0(%arg0: i32, %arg1: i32) -> (i32, i32) {
    %c0_i32 = arith.constant 0 : i32
    return %arg0, %arg1 : i32, i32
  }
  func.func @transform_1(%arg0: i32, %arg1: i32) -> (i32, i32) {
    %c0_i32 = arith.constant 0 : i32
    %c0_i32_0 = arith.constant 0 : i32
    %c0_i32_1 = arith.constant 0 : i32
    return %c0_i32, %c0_i32_0 : i32, i32
  }
  func.func @transform_2(%arg0: i32, %arg1: i32) -> (i32, i32) {
    %c0_i32 = arith.constant 0 : i32
    %c0_i32_0 = arith.constant 0 : i32
    return %arg0, %c0_i32 : i32, i32
  }
}

</mosaic_0001>

<llo_original>
// kernel: tpu_custom_call.1
$region0: #{tpu_custom_call.1}
  #allocation0 [shape = 'u32[]', space=smem, size = 0x4, offset = 0x4, fixed_abs, tag = 'smem constant byte address 0x4 - core index']
  #allocation1 [shape = 'u32[144,128]{1,0:T(1,128)}', space=vmem, size = 0x12000, scoped, tag = 'internal scratch']
  #allocation2 [shape = 'f32[256,128]{1,0:T(8,128)}', space=vmem, size = 0x20000, scoped, tag = 'scratch operand']
  %s0 = inlined_call_operand.hbm [shape: f32[1024,1024], index: 0, kind: input, shape index: {}]
  %s1 = inlined_call_operand.hbm [shape: f32[1024,128], index: 1, kind: input, shape index: {}]
  %s2 = inlined_call_operand.hbm [shape: f32[1024,128], index: 2, kind: output, shape index: {}]
  %s3 = sld [smem:[#allocation0]]
  $region57: #{tpu_custom_call.1} parent=0
    _
  %s5 = ssub.s32 1, %s3
  %s6 = scalar_select 0, %s5, %s3
  $region1: #{tpu_custom_call.1} parent=0
    #allocation3 [shape = 'u8[1048576]{0}', space=vmem, size = 0x100000, scoped, tag = 'input window, operand 0']
    #allocation4 [shape = 's32[2]{0}', space=sflag, size = 0x8, scoped, tag = 'scoped memory for tpu_custom_call.1']
    #allocation5 [shape = 's32[2]{0}', space=sflag, size = 0x8, scoped, tag = 'scoped memory for tpu_custom_call.1']
    #allocation6 [shape = 'u8[524288]{0}', space=vmem, size = 0x80000, scoped, tag = 'input window, operand 1, single buffered']
    #allocation7 [shape = 's32[1]{0}', space=sflag, size = 0x4, scoped, tag = 'scoped memory for tpu_custom_call.1']
    #allocation8 [shape = 'u8[262144]{0}', space=vmem, size = 0x40000, scoped, tag = 'output window, operand 0']
    %7 = vsyncpa [#allocation4], 0
    %s8 = scalar_lea.sflag [#allocation4], 1
    %9 = vsyncpa %s8, 0
    %10 = vsyncpa [#allocation7], 0
    %11 = vsyncpa [#allocation5], 0
    %s12 = scalar_lea.sflag [#allocation5], 1
    %13 = vsyncpa %s12, 0
    loop: start=0, step=1, limit=10
    $region2: #{tpu_custom_call.1} parent=1 // loop_pre_header
      _
    $region3: #{tpu_custom_call.1} parent=1 // loop_header
      %s15 = sphi 0, %s19
      %p16 = scmp.ge.s32.totalorder %s15, 10
      %s22 = sphi 0, %s34
      %s23 = sphi 0, %s30
      %s24 = sphi 0, %s22
      %s25 = sphi 0, %s23
      %s26 = sphi 0, %s24
      %s27 = sphi 0, %s25
      %s39 = sphi 0, %s41
      %s42 = sphi 0, %s39
      %s43 = sphi 0, %s42
      %s59 = sphi 0, %s43
      %s63 = sphi 0, %s63
      %s65 = sphi 0, %s63
      %s66 = sphi 0, %s65
      %s80 = sphi 0, %s66
      %s86 = sphi 0, %s88
      %s89 = sphi 0, %s86
      %s90 = sphi 0, %s89
      %s106 = sphi 0, %s90
    $region4: #{tpu_custom_call.1} parent=1 // loop_header_branch
      %18 = sbr.rel (%p16) target = $region8
    $region5: #{tpu_custom_call.1} parent=1 // loop_body
      %s20 = ssub.s32 %s15, 1
      %s21 = ssub.s32 %s15, 2
      %s28 = sadd.s32 1, %s23
      %p29 = scmp.ge.s32.totalorder %s28, 2
      %s30 = scalar_select %p29, 0, %s28
      %s31 = sadd.s32 1, %s22
      %s32 = scalar_select %p29, %s31, %s22
      %p33 = scmp.ge.s32.totalorder %s32, 4
      %s34 = scalar_select %p33, 0, %s32
      %s35 = ssub.s32 %s22, %s34
      %s36 = ssub.s32 %s23, %s30
      %s37 = sor.u32 %s35, %s36
      %p38 = scmp.eq.s32.totalorder %s37, 0
      %s40 = sadd.s32 %s39, 1
      %s41 = scalar_select %p38, %s39, %s40
      %p44 = pneg %p38
      %p45 = scmp.eq.s32.totalorder %s15, 7
      %p46 = por %p44, %p45
      %p47 = scmp.ne.s32.totalorder %s39, %s42
      %p48 = scmp.eq.s32.totalorder %s15, 0
      %p49 = por %p47, %p48
      %p50 = scmp.ne.s32.totalorder %s39, %s42
      %p51 = scmp.eq.s32.totalorder %s20, 7
      %p52 = por %p50, %p51
      %p53 = scmp.ne.s32.totalorder %s42, %s43
      %p54 = scmp.eq.s32.totalorder %s20, 0
      %p55 = por %p53, %p54
      %p56 = scmp.ne.s32.totalorder %s42, %s43
      %p57 = scmp.eq.s32.totalorder %s21, 7
      %p58 = por %p56, %p57
      %p60 = scmp.ne.s32.totalorder %s43, %s59
      %p61 = scmp.eq.s32.totalorder %s21, 0
      %p62 = por %p60, %p61
      %s64 = sadd.s32 %s63, 1
      %p67 = scmp.eq.s32.totalorder %s15, 7
      %p68 = scmp.ne.s32.totalorder %s63, %s65
      %p69 = scmp.eq.s32.totalorder %s15, 0
      %p70 = por %p68, %p69
      %p71 = scmp.ne.s32.totalorder %s63, %s65
      %p72 = scmp.eq.s32.totalorder %s20, 7
      %p73 = por %p71, %p72
      %p74 = scmp.ne.s32.totalorder %s65, %s66
      %p75 = scmp.eq.s32.totalorder %s20, 0
      %p76 = por %p74, %p75
      %p77 = scmp.ne.s32.totalorder %s65, %s66
      %p78 = scmp.eq.s32.totalorder %s21, 7
      %p79 = por %p77, %p78
      %p81 = scmp.ne.s32.totalorder %s66, %s80
      %p82 = scmp.eq.s32.totalorder %s21, 0
      %p83 = por %p81, %p82
      %s84 = ssub.s32 %s22, %s34
      %p85 = scmp.eq.s32.totalorder %s84, 0
      %s87 = sadd.s32 %s86, 1
      %s88 = scalar_select %p85, %s86, %s87
      %p91 = pneg %p85
      %p92 = scmp.eq.s32.totalorder %s15, 7
      %p93 = por %p91, %p92
      %p94 = scmp.ne.s32.totalorder %s86, %s89
      %p95 = scmp.eq.s32.totalorder %s15, 0
      %p96 = por %p94, %p95
      %p97 = scmp.ne.s32.totalorder %s86, %s89
      %p98 = scmp.eq.s32.totalorder %s20, 7
      %p99 = por %p97, %p98
      %p100 = scmp.ne.s32.totalorder %s89, %s90
      %p101 = scmp.eq.s32.totalorder %s20, 0
      %p102 = por %p100, %p101
      %p103 = scmp.ne.s32.totalorder %s89, %s90
      %p104 = scmp.eq.s32.totalorder %s21, 7
      %p105 = por %p103, %p104
      %p107 = scmp.ne.s32.totalorder %s90, %s106
      %p108 = scmp.eq.s32.totalorder %s21, 0
      %p109 = por %p107, %p108
      %p110 = scmp.le.s32.totalorder 1, %s15
      %p111 = scmp.lt.s32.totalorder %s15, 9
      %p112 = pnand %p110, %p111
      %p113 = pneg %p112
      // Predicated region
      $region9: #{tpu_custom_call.1} parent=5 // pred_check
        _
      $region10: #{tpu_custom_call.1} parent=5 // pred_check_branch
        %115 = sbr.rel (%p112) target = $region12
      $region11: #{tpu_custom_call.1} parent=5 // pred_region
        %s116 = ssub.s32 %s15, 1
        // Predicated region
        $region13: #{tpu_custom_call.1} parent=11 // pred_check
          %p117 = pneg %p76
        $region14: #{tpu_custom_call.1} parent=11 // pred_check_branch
          %119 = sbr.rel (%p117) target = $region16
        $region15: #{tpu_custom_call.1} parent=11 // pred_region
          %s121 = ssub.s32 16384, 16384
          %122 = vsyncadd [#allocation7], %s121
          %s123 = sshll.u32 [#allocation6], 4
          %s124 = int_to_ptr.vmem [resolvable:$true] %s123
          %129 = dma.hbm_to_vmem [thread:$0]  %s1, 16384, %s124, [#allocation7], 128, 128, 8
        $region16: #{tpu_custom_call.1} parent=11 // pred_fallthru
          _
      $region12: #{tpu_custom_call.1} parent=5 // pred_fallthru
        _
      %p130 = scmp.lt.s32.totalorder %s15, 8
      // Predicated region
      $region17: #{tpu_custom_call.1} parent=5 // pred_check
        %p131 = pneg %p130
      $region18: #{tpu_custom_call.1} parent=5 // pred_check_branch
        %133 = sbr.rel (%p131) target = $region20
      $region19: #{tpu_custom_call.1} parent=5 // pred_region
        // Predicated region
        $region21: #{tpu_custom_call.1} parent=19 // pred_check
          %p134 = pneg %p49
        $region22: #{tpu_custom_call.1} parent=19 // pred_check_branch
          %136 = sbr.rel (%p134) target = $region24
        $region23: #{tpu_custom_call.1} parent=19 // pred_region
          %s137 = sand.u32 %s39, 1
          %s138 = scalar_lea.sflag [#allocation4], %s137
          %s139 = sand.u32 %s39, 1
          %s140 = smul.addr %s139, 1024
          %s141 = scalar_lea.vmem [#allocation3], %s140
          %s142 = smul.u32 32, %s22
          %s143 = smul.u32 4, %s23
          %s145 = ssub.s32 16384, 16384
          %146 = vsyncadd %s138, %s145
          %s147 = smul.addr %s142, 8
          %s148 = sadd.s32 %s143, %s147
          %s149 = smul.addr %s148, 128
          %s150 = scalar_lea.hbm %s0, %s149
          %s151 = sshll.u32 %s141, 4
          %s152 = int_to_ptr.vmem [resolvable:$true] %s151
          %157 = dma.hbm_to_vmem [thread:$0]  %s150, 16384, %s152, %s138, 1024, 512, 32
        $region24: #{tpu_custom_call.1} parent=19 // pred_fallthru
          _
      $region20: #{tpu_custom_call.1} parent=5 // pred_fallthru
        _
      %p158 = scmp.le.s32.totalorder 1, %s15
      %p159 = scmp.lt.s32.totalorder %s15, 9
      %p160 = pnand %p158, %p159
      %p161 = pneg %p160
      // Predicated region
      $region25: #{tpu_custom_call.1} parent=5 // pred_check
        _
      $region26: #{tpu_custom_call.1} parent=5 // pred_check_branch
        %163 = sbr.rel (%p160) target = $region28
      $region27: #{tpu_custom_call.1} parent=5 // pred_region
        %s164 = ssub.s32 %s15, 1
        %s165 = sand.u32 %s42, 1
        %s166 = scalar_lea.sflag [#allocation4], %s165
        %s167 = sand.u32 %s42, 1
        %s168 = smul.addr %s167, 1024
        %s169 = scalar_lea.vmem [#allocation3], %s168
        // Predicated region
        $region29: #{tpu_custom_call.1} parent=27 // pred_check
          %p170 = pneg %p55
        $region30: #{tpu_custom_call.1} parent=27 // pred_check_branch
          %172 = sbr.rel (%p170) target = $region32
        $region31: #{tpu_custom_call.1} parent=27 // pred_region
          %173 = dma.done %s166, 16384
        $region32: #{tpu_custom_call.1} parent=27 // pred_fallthru
          _
        // Predicated region
        $region33: #{tpu_custom_call.1} parent=27 // pred_check
          %p174 = pneg %p76
        $region34: #{tpu_custom_call.1} parent=27 // pred_check_branch
          %176 = sbr.rel (%p174) target = $region36
        $region35: #{tpu_custom_call.1} parent=27 // pred_region
          %177 = dma.done [#allocation7], 16384
        $region36: #{tpu_custom_call.1} parent=27 // pred_fallthru
          _
        %s178 = sand.u32 %s42, 1
        %s179 = scalar_lea.sflag [#allocation4], %s178
        %s180 = sand.u32 %s42, 1
        %s181 = smul.addr %s180, 1024
        %s182 = scalar_lea.vmem [#allocation3], %s181
        %p183 = pneg %p55
        %p184 = pneg %p52
        %p185 = pneg %p76
        %p186 = pneg %p73
        %p187 = pneg %p102
        %p188 = pneg %p99
        %s189 = sand.u32 %s89, 1
        %s190 = scalar_lea.sflag [#allocation5], %s189
        %s191 = sand.u32 %s89, 1
        %s192 = smul.addr %s191, 256
        %s193 = scalar_lea.vmem [#allocation8], %s192
        %s194 = smul.u32 32, %s24
        %s195 = smul.u32 4, %s25
        %s196 = smul.u32 32, %s24
        %p197 = scmp.eq.s32.totalorder %s25, 0
        // Predicated region
        $region37: #{tpu_custom_call.1} parent=27 // pred_check
          %p198 = pneg %p197
        $region38: #{tpu_custom_call.1} parent=27 // pred_check_branch
          %200 = sbr.rel (%p198) target = $region40
        $region39: #{tpu_custom_call.1} parent=27 // pred_region
          %201 = vst [vmem:[#allocation2] sm:$0xff] 0.0
          %202 = vst [vmem:[#allocation2 + $0x8] sm:$0xff] 0.0
          %203 = vst [vmem:[#allocation2 + $0x10] sm:$0xff] 0.0
          %204 = vst [vmem:[#allocation2 + $0x18] sm:$0xff] 0.0
          %205 = vst [vmem:[#allocation2 + $0x20] sm:$0xff] 0.0
          %206 = vst [vmem:[#allocation2 + $0x28] sm:$0xff] 0.0
          %207 = vst [vmem:[#allocation2 + $0x30] sm:$0xff] 0.0
          %208 = vst [vmem:[#allocation2 + $0x38] sm:$0xff] 0.0
          %209 = vst [vmem:[#allocation2 + $0x40] sm:$0xff] 0.0
          %210 = vst [vmem:[#allocation2 + $0x48] sm:$0xff] 0.0
          %211 = vst [vmem:[#allocation2 + $0x50] sm:$0xff] 0.0
          %212 = vst [vmem:[#allocation2 + $0x58] sm:$0xff] 0.0
          %213 = vst [vmem:[#allocation2 + $0x60] sm:$0xff] 0.0
          %214 = vst [vmem:[#allocation2 + $0x68] sm:$0xff] 0.0
          %215 = vst [vmem:[#allocation2 + $0x70] sm:$0xff] 0.0
          %216 = vst [vmem:[#allocation2 + $0x78] sm:$0xff] 0.0
          %217 = vst [vmem:[#allocation2 + $0x80] sm:$0xff] 0.0
          %218 = vst [vmem:[#allocation2 + $0x88] sm:$0xff] 0.0
          %219 = vst [vmem:[#allocation2 + $0x90] sm:$0xff] 0.0
          %220 = vst [vmem:[#allocation2 + $0x98] sm:$0xff] 0.0
          %221 = vst [vmem:[#allocation2 + $0xa0] sm:$0xff] 0.0
          %222 = vst [vmem:[#allocation2 + $0xa8] sm:$0xff] 0.0
          %223 = vst [vmem:[#allocation2 + $0xb0] sm:$0xff] 0.0
          %224 = vst [vmem:[#allocation2 + $0xb8] sm:$0xff] 0.0
          %225 = vst [vmem:[#allocation2 + $0xc0] sm:$0xff] 0.0
          %226 = vst [vmem:[#allocation2 + $0xc8] sm:$0xff] 0.0
          %227 = vst [vmem:[#allocation2 + $0xd0] sm:$0xff] 0.0
          %228 = vst [vmem:[#allocation2 + $0xd8] sm:$0xff] 0.0
          %229 = vst [vmem:[#allocation2 + $0xe0] sm:$0xff] 0.0
          %230 = vst [vmem:[#allocation2 + $0xe8] sm:$0xff] 0.0
          %231 = vst [vmem:[#allocation2 + $0xf0] sm:$0xff] 0.0
          %232 = vst [vmem:[#allocation2 + $0xf8] sm:$0xff] 0.0
        $region40: #{tpu_custom_call.1} parent=27 // pred_fallthru
          _
        %s233 = smul.u32 %s25, 512
        %v234 = vld [vmem:[#allocation2] sm:$0xff]
        %v235 = vld [vmem:[#allocation2 + $0x8] sm:$0xff]
        %v236 = vld [vmem:[#allocation2 + $0x10] sm:$0xff]
        %v237 = vld [vmem:[#allocation2 + $0x18] sm:$0xff]
        %v238 = vld [vmem:[#allocation2 + $0x20] sm:$0xff]
        %v239 = vld [vmem:[#allocation2 + $0x28] sm:$0xff]
        %v240 = vld [vmem:[#allocation2 + $0x30] sm:$0xff]
        %v241 = vld [vmem:[#allocation2 + $0x38] sm:$0xff]
        %v242 = vld [vmem:[#allocation2 + $0x40] sm:$0xff]
        %v243 = vld [vmem:[#allocation2 + $0x48] sm:$0xff]
        %v244 = vld [vmem:[#allocation2 + $0x50] sm:$0xff]
        %v245 = vld [vmem:[#allocation2 + $0x58] sm:$0xff]
        %v246 = vld [vmem:[#allocation2 + $0x60] sm:$0xff]
        %v247 = vld [vmem:[#allocation2 + $0x68] sm:$0xff]
        %v248 = vld [vmem:[#allocation2 + $0x70] sm:$0xff]
        %v249 = vld [vmem:[#allocation2 + $0x78] sm:$0xff]
        %v250 = vld [vmem:[#allocation2 + $0x80] sm:$0xff]
        %v251 = vld [vmem:[#allocation2 + $0x88] sm:$0xff]
        %v252 = vld [vmem:[#allocation2 + $0x90] sm:$0xff]
        %v253 = vld [vmem:[#allocation2 + $0x98] sm:$0xff]
        %v254 = vld [vmem:[#allocation2 + $0xa0] sm:$0xff]
        %v255 = vld [vmem:[#allocation2 + $0xa8] sm:$0xff]
        %v256 = vld [vmem:[#allocation2 + $0xb0] sm:$0xff]
        %v257 = vld [vmem:[#allocation2 + $0xb8] sm:$0xff]
        %v258 = vld [vmem:[#allocation2 + $0xc0] sm:$0xff]
        %v259 = vld [vmem:[#allocation2 + $0xc8] sm:$0xff]
        %v260 = vld [vmem:[#allocation2 + $0xd0] sm:$0xff]
        %v261 = vld [vmem:[#allocation2 + $0xd8] sm:$0xff]
        %v262 = vld [vmem:[#allocation2 + $0xe0] sm:$0xff]
        %v263 = vld [vmem:[#allocation2 + $0xe8] sm:$0xff]
        %v264 = vld [vmem:[#allocation2 + $0xf0] sm:$0xff]
        %v265 = vld [vmem:[#allocation2 + $0xf8] sm:$0xff]
        %v266 = vld [vmem:[%s169] sm:$0xff]
        %v267 = vld [vmem:[%s169 + $0x8] sm:$0xff]
        %v268 = vld [vmem:[%s169 + $0x10] sm:$0xff]
        %v269 = vld [vmem:[%s169 + $0x18] sm:$0xff]
        %v270 = vld [vmem:[%s169 + $0x20] sm:$0xff]
        %v271 = vld [vmem:[%s169 + $0x28] sm:$0xff]
        %v272 = vld [vmem:[%s169 + $0x30] sm:$0xff]
        %v273 = vld [vmem:[%s169 + $0x38] sm:$0xff]
        %v274 = vld [vmem:[%s169 + $0x40] sm:$0xff]
        %v275 = vld [vmem:[%s169 + $0x48] sm:$0xff]
        %v276 = vld [vmem:[%s169 + $0x50] sm:$0xff]
        %v277 = vld [vmem:[%s169 + $0x58] sm:$0xff]
        %v278 = vld [vmem:[%s169 + $0x60] sm:$0xff]
        %v279 = vld [vmem:[%s169 + $0x68] sm:$0xff]
        %v280 = vld [vmem:[%s169 + $0x70] sm:$0xff]
        %v281 = vld [vmem:[%s169 + $0x78] sm:$0xff]
        %v282 = vld [vmem:[%s169 + $0x80] sm:$0xff]
        %v283 = vld [vmem:[%s169 + $0x88] sm:$0xff]
        %v284 = vld [vmem:[%s169 + $0x90] sm:$0xff]
        %v285 = vld [vmem:[%s169 + $0x98] sm:$0xff]
        %v286 = vld [vmem:[%s169 + $0xa0] sm:$0xff]
        %v287 = vld [vmem:[%s169 + $0xa8] sm:$0xff]
        %v288 = vld [vmem:[%s169 + $0xb0] sm:$0xff]
        %v289 = vld [vmem:[%s169 + $0xb8] sm:$0xff]
        %v290 = vld [vmem:[%s169 + $0xc0] sm:$0xff]
        %v291 = vld [vmem:[%s169 + $0xc8] sm:$0xff]
        %v292 = vld [vmem:[%s169 + $0xd0] sm:$0xff]
        %v293 = vld [vmem:[%s169 + $0xd8] sm:$0xff]
        %v294 = vld [vmem:[%s169 + $0xe0] sm:$0xff]
        %v295 = vld [vmem:[%s169 + $0xe8] sm:$0xff]
        %v296 = vld [vmem:[%s169 + $0xf0] sm:$0xff]
        %v297 = vld [vmem:[%s169 + $0xf8] sm:$0xff]
        %v298 = vld [vmem:[%s169 + $0x100] sm:$0xff]
        %v299 = vld [vmem:[%s169 + $0x108] sm:$0xff]
        %v300 = vld [vmem:[%s169 + $0x110] sm:$0xff]
        %v301 = vld [vmem:[%s169 + $0x118] sm:$0xff]
        %v302 = vld [vmem:[%s169 + $0x120] sm:$0xff]
        %v303 = vld [vmem:[%s169 + $0x128] sm:$0xff]
        %v304 = vld [vmem:[%s169 + $0x130] sm:$0xff]
        %v305 = vld [vmem:[%s169 + $0x138] sm:$0xff]
        %v306 = vld [vmem:[%s169 + $0x140] sm:$0xff]
        %v307 = vld [vmem:[%s169 + $0x148] sm:$0xff]
        %v308 = vld [vmem:[%s169 + $0x150] sm:$0xff]
        %v309 = vld [vmem:[%s169 + $0x158] sm:$0xff]
        %v310 = vld [vmem:[%s169 + $0x160] sm:$0xff]
        %v311 = vld [vmem:[%s169 + $0x168] sm:$0xff]
        %v312 = vld [vmem:[%s169 + $0x170] sm:$0xff]
        %v313 = vld [vmem:[%s169 + $0x178] sm:$0xff]
        %v314 = vld [vmem:[%s169 + $0x180] sm:$0xff]
        %v315 = vld [vmem:[%s169 + $0x188] sm:$0xff]
        %v316 = vld [vmem:[%s169 + $0x190] sm:$0xff]
        %v317 = vld [vmem:[%s169 + $0x198] sm:$0xff]
        %v318 = vld [vmem:[%s169 + $0x1a0] sm:$0xff]
        %v319 = vld [vmem:[%s169 + $0x1a8] sm:$0xff]
        %v320 = vld [vmem:[%s169 + $0x1b0] sm:$0xff]
        %v321 = vld [vmem:[%s169 + $0x1b8] sm:$0xff]
        %v322 = vld [vmem:[%s169 + $0x1c0] sm:$0xff]
        %v323 = vld [vmem:[%s169 + $0x1c8] sm:$0xff]
        %v324 = vld [vmem:[%s169 + $0x1d0] sm:$0xff]
        %v325 = vld [vmem:[%s169 + $0x1d8] sm:$0xff]
        %v326 = vld [vmem:[%s169 + $0x1e0] sm:$0xff]
        %v327 = vld [vmem:[%s169 + $0x1e8] sm:$0xff]
        %v328 = vld [vmem:[%s169 + $0x1f0] sm:$0xff]
        %v329 = vld [vmem:[%s169 + $0x1f8] sm:$0xff]
        %v330 = vld [vmem:[%s169 + $0x200] sm:$0xff]
        %v331 = vld [vmem:[%s169 + $0x208] sm:$0xff]
        %v332 = vld [vmem:[%s169 + $0x210] sm:$0xff]
        %v333 = vld [vmem:[%s169 + $0x218] sm:$0xff]
        %v334 = vld [vmem:[%s169 + $0x220] sm:$0xff]
        %v335 = vld [vmem:[%s169 + $0x228] sm:$0xff]
        %v336 = vld [vmem:[%s169 + $0x230] sm:$0xff]
        %v337 = vld [vmem:[%s169 + $0x238] sm:$0xff]
        %v338 = vld [vmem:[%s169 + $0x240] sm:$0xff]
        %v339 = vld [vmem:[%s169 + $0x248] sm:$0xff]
        %v340 = vld [vmem:[%s169 + $0x250] sm:$0xff]
        %v341 = vld [vmem:[%s169 + $0x258] sm:$0xff]
        %v342 = vld [vmem:[%s169 + $0x260] sm:$0xff]
        %v343 = vld [vmem:[%s169 + $0x268] sm:$0xff]
        %v344 = vld [vmem:[%s169 + $0x270] sm:$0xff]
        %v345 = vld [vmem:[%s169 + $0x278] sm:$0xff]
        %v346 = vld [vmem:[%s169 + $0x280] sm:$0xff]
        %v347 = vld [vmem:[%s169 + $0x288] sm:$0xff]
        %v348 = vld [vmem:[%s169 + $0x290] sm:$0xff]
        %v349 = vld [vmem:[%s169 + $0x298] sm:$0xff]
        %v350 = vld [vmem:[%s169 + $0x2a0] sm:$0xff]
        %v351 = vld [vmem:[%s169 + $0x2a8] sm:$0xff]
        %v352 = vld [vmem:[%s169 + $0x2b0] sm:$0xff]
        %v353 = vld [vmem:[%s169 + $0x2b8] sm:$0xff]
        %v354 = vld [vmem:[%s169 + $0x2c0] sm:$0xff]
        %v355 = vld [vmem:[%s169 + $0x2c8] sm:$0xff]
        %v356 = vld [vmem:[%s169 + $0x2d0] sm:$0xff]
        %v357 = vld [vmem:[%s169 + $0x2d8] sm:$0xff]
        %v358 = vld [vmem:[%s169 + $0x2e0] sm:$0xff]
        %v359 = vld [vmem:[%s169 + $0x2e8] sm:$0xff]
        %v360 = vld [vmem:[%s169 + $0x2f0] sm:$0xff]
        %v361 = vld [vmem:[%s169 + $0x2f8] sm:$0xff]
        %v362 = vld [vmem:[%s169 + $0x300] sm:$0xff]
        %v363 = vld [vmem:[%s169 + $0x308] sm:$0xff]
        %v364 = vld [vmem:[%s169 + $0x310] sm:$0xff]
        %v365 = vld [vmem:[%s169 + $0x318] sm:$0xff]
        %v366 = vld [vmem:[%s169 + $0x320] sm:$0xff]
        %v367 = vld [vmem:[%s169 + $0x328] sm:$0xff]
        %v368 = vld [vmem:[%s169 + $0x330] sm:$0xff]
        %v369 = vld [vmem:[%s169 + $0x338] sm:$0xff]
        %v370 = vld [vmem:[%s169 + $0x340] sm:$0xff]
        %v371 = vld [vmem:[%s169 + $0x348] sm:$0xff]
        %v372 = vld [vmem:[%s169 + $0x350] sm:$0xff]
        %v373 = vld [vmem:[%s169 + $0x358] sm:$0xff]
        %v374 = vld [vmem:[%s169 + $0x360] sm:$0xff]
        %v375 = vld [vmem:[%s169 + $0x368] sm:$0xff]
        %v376 = vld [vmem:[%s169 + $0x370] sm:$0xff]
        %v377 = vld [vmem:[%s169 + $0x378] sm:$0xff]
        %v378 = vld [vmem:[%s169 + $0x380] sm:$0xff]
        %v379 = vld [vmem:[%s169 + $0x388] sm:$0xff]
        %v380 = vld [vmem:[%s169 + $0x390] sm:$0xff]
        %v381 = vld [vmem:[%s169 + $0x398] sm:$0xff]
        %v382 = vld [vmem:[%s169 + $0x3a0] sm:$0xff]
        %v383 = vld [vmem:[%s169 + $0x3a8] sm:$0xff]
        %v384 = vld [vmem:[%s169 + $0x3b0] sm:$0xff]
        %v385 = vld [vmem:[%s169 + $0x3b8] sm:$0xff]
        %v386 = vld [vmem:[%s169 + $0x3c0] sm:$0xff]
        %v387 = vld [vmem:[%s169 + $0x3c8] sm:$0xff]
        %v388 = vld [vmem:[%s169 + $0x3d0] sm:$0xff]
        %v389 = vld [vmem:[%s169 + $0x3d8] sm:$0xff]
        %v390 = vld [vmem:[%s169 + $0x3e0] sm:$0xff]
        %v391 = vld [vmem:[%s169 + $0x3e8] sm:$0xff]
        %v392 = vld [vmem:[%s169 + $0x3f0] sm:$0xff]
        %v393 = vld [vmem:[%s169 + $0x3f8] sm:$0xff]
        %s394 = scalar_lea.vmem [#allocation6], %s233
        %v395 = vld [vmem:[%s394] sm:$0xff]
        %v396 = vld [vmem:[%s394 + $0x8] sm:$0xff]
        %v397 = vld [vmem:[%s394 + $0x10] sm:$0xff]
        %v398 = vld [vmem:[%s394 + $0x18] sm:$0xff]
        %v399 = vld [vmem:[%s394 + $0x20] sm:$0xff]
        %v400 = vld [vmem:[%s394 + $0x28] sm:$0xff]
        %v401 = vld [vmem:[%s394 + $0x30] sm:$0xff]
        %v402 = vld [vmem:[%s394 + $0x38] sm:$0xff]
        %v403 = vld [vmem:[%s394 + $0x40] sm:$0xff]
        %v404 = vld [vmem:[%s394 + $0x48] sm:$0xff]
        %v405 = vld [vmem:[%s394 + $0x50] sm:$0xff]
        %v406 = vld [vmem:[%s394 + $0x58] sm:$0xff]
        %v407 = vld [vmem:[%s394 + $0x60] sm:$0xff]
        %v408 = vld [vmem:[%s394 + $0x68] sm:$0xff]
        %v409 = vld [vmem:[%s394 + $0x70] sm:$0xff]
        %v410 = vld [vmem:[%s394 + $0x78] sm:$0xff]
        %v411 = vld [vmem:[%s394 + $0x80] sm:$0xff]
        %v412 = vld [vmem:[%s394 + $0x88] sm:$0xff]
        %v413 = vld [vmem:[%s394 + $0x90] sm:$0xff]
        %v414 = vld [vmem:[%s394 + $0x98] sm:$0xff]
        %v415 = vld [vmem:[%s394 + $0xa0] sm:$0xff]
        %v416 = vld [vmem:[%s394 + $0xa8] sm:$0xff]
        %v417 = vld [vmem:[%s394 + $0xb0] sm:$0xff]
        %v418 = vld [vmem:[%s394 + $0xb8] sm:$0xff]
        %v419 = vld [vmem:[%s394 + $0xc0] sm:$0xff]
        %v420 = vld [vmem:[%s394 + $0xc8] sm:$0xff]
        %v421 = vld [vmem:[%s394 + $0xd0] sm:$0xff]
        %v422 = vld [vmem:[%s394 + $0xd8] sm:$0xff]
        %v423 = vld [vmem:[%s394 + $0xe0] sm:$0xff]
        %v424 = vld [vmem:[%s394 + $0xe8] sm:$0xff]
        %v425 = vld [vmem:[%s394 + $0xf0] sm:$0xff]
        %v426 = vld [vmem:[%s394 + $0xf8] sm:$0xff]
        %v427 = vld [vmem:[%s394 + $0x100] sm:$0xff]
        %v428 = vld [vmem:[%s394 + $0x108] sm:$0xff]
        %v429 = vld [vmem:[%s394 + $0x110] sm:$0xff]
        %v430 = vld [vmem:[%s394 + $0x118] sm:$0xff]
        %v431 = vld [vmem:[%s394 + $0x120] sm:$0xff]
        %v432 = vld [vmem:[%s394 + $0x128] sm:$0xff]
        %v433 = vld [vmem:[%s394 + $0x130] sm:$0xff]
        %v434 = vld [vmem:[%s394 + $0x138] sm:$0xff]
        %v435 = vld [vmem:[%s394 + $0x140] sm:$0xff]
        %v436 = vld [vmem:[%s394 + $0x148] sm:$0xff]
        %v437 = vld [vmem:[%s394 + $0x150] sm:$0xff]
        %v438 = vld [vmem:[%s394 + $0x158] sm:$0xff]
        %v439 = vld [vmem:[%s394 + $0x160] sm:$0xff]
        %v440 = vld [vmem:[%s394 + $0x168] sm:$0xff]
        %v441 = vld [vmem:[%s394 + $0x170] sm:$0xff]
        %v442 = vld [vmem:[%s394 + $0x178] sm:$0xff]
        %v443 = vld [vmem:[%s394 + $0x180] sm:$0xff]
        %v444 = vld [vmem:[%s394 + $0x188] sm:$0xff]
        %v445 = vld [vmem:[%s394 + $0x190] sm:$0xff]
        %v446 = vld [vmem:[%s394 + $0x198] sm:$0xff]
        %v447 = vld [vmem:[%s394 + $0x1a0] sm:$0xff]
        %v448 = vld [vmem:[%s394 + $0x1a8] sm:$0xff]
        %v449 = vld [vmem:[%s394 + $0x1b0] sm:$0xff]
        %v450 = vld [vmem:[%s394 + $0x1b8] sm:$0xff]
        %v451 = vld [vmem:[%s394 + $0x1c0] sm:$0xff]
        %v452 = vld [vmem:[%s394 + $0x1c8] sm:$0xff]
        %v453 = vld [vmem:[%s394 + $0x1d0] sm:$0xff]
        %v454 = vld [vmem:[%s394 + $0x1d8] sm:$0xff]
        %v455 = vld [vmem:[%s394 + $0x1e0] sm:$0xff]
        %v456 = vld [vmem:[%s394 + $0x1e8] sm:$0xff]
        %v457 = vld [vmem:[%s394 + $0x1f0] sm:$0xff]
        %v458 = vld [vmem:[%s394 + $0x1f8] sm:$0xff]
        %459 = vmatprep.subr.mxu0 0.0
        %460 = vmatpush1.msra.mxu0 %v395
        %461 = vmatprep.subr.mxu0 0.0
        %462 = vmatpush1.msra.mxu0 %v396
        %463 = vmatprep.subr.mxu0 0.0
        %464 = vmatpush1.msra.mxu0 %v397
        %465 = vmatprep.subr.mxu0 0.0
        %466 = vmatpush1.msra.mxu0 %v398
        %467 = vmatprep.subr.mxu0 0.0
        %468 = vmatpush1.msra.mxu0 %v399
        %469 = vmatprep.subr.mxu0 0.0
        %470 = vmatpush1.msra.mxu0 %v400
        %471 = vmatprep.subr.mxu0 0.0
        %472 = vmatpush1.msra.mxu0 %v401
        %473 = vmatprep.subr.mxu0 0.0
        %474 = vmatpush1.msra.mxu0 %v402
        %475 = vmatprep.subr.mxu0 0.0
        %476 = vmatpush1.msra.mxu0 %v403
        %477 = vmatprep.subr.mxu0 0.0
        %478 = vmatpush1.msra.mxu0 %v404
        %479 = vmatprep.subr.mxu0 0.0
        %480 = vmatpush1.msra.mxu0 %v405
        %481 = vmatprep.subr.mxu0 0.0
        %482 = vmatpush1.msra.mxu0 %v406
        %483 = vmatprep.subr.mxu0 0.0
        %484 = vmatpush1.msra.mxu0 %v407
        %485 = vmatprep.subr.mxu0 0.0
        %486 = vmatpush1.msra.mxu0 %v408
        %487 = vmatprep.subr.mxu0 0.0
        %488 = vmatpush1.msra.mxu0 %v409
        %489 = vmatprep.subr.mxu0 0.0
        %490 = vmatpush1.msra.mxu0 %v410
        %491 = vmatprep.subr.mxu0 0.0
        %492 = vmatpush1.msra.mxu0 %v411
        %493 = vmatprep.subr.mxu0 0.0
        %494 = vmatpush1.msra.mxu0 %v412
        %495 = vmatprep.subr.mxu0 0.0
        %496 = vmatpush1.msra.mxu0 %v413
        %497 = vmatprep.subr.mxu0 0.0
        %498 = vmatpush1.msra.mxu0 %v414
        %499 = vmatprep.subr.mxu0 0.0
        %500 = vmatpush1.msra.mxu0 %v415
        %501 = vmatprep.subr.mxu0 0.0
        %502 = vmatpush1.msra.mxu0 %v416
        %503 = vmatprep.subr.mxu0 0.0
        %504 = vmatpush1.msra.mxu0 %v417
        %505 = vmatprep.subr.mxu0 0.0
        %506 = vmatpush1.msra.mxu0 %v418
        %507 = vmatprep.subr.mxu0 0.0
        %508 = vmatpush1.msra.mxu0 %v419
        %509 = vmatprep.subr.mxu0 0.0
        %510 = vmatpush1.msra.mxu0 %v420
        %511 = vmatprep.subr.mxu0 0.0
        %512 = vmatpush1.msra.mxu0 %v421
        %513 = vmatprep.subr.mxu0 0.0
        %514 = vmatpush1.msra.mxu0 %v422
        %515 = vmatprep.subr.mxu0 0.0
        %516 = vmatpush1.msra.mxu0 %v423
        %517 = vmatprep.subr.mxu0 0.0
        %518 = vmatpush1.msra.mxu0 %v424
        %519 = vmatprep.subr.mxu0 0.0
        %520 = vmatpush1.msra.mxu0 %v425
        %521 = vmatprep.subr.mxu0 0.0
        %522 = vmatpush1.msra.mxu0 %v426
        %523 = vmatprep.mubr.f32.mxu0 %v267
        %524 = vmatmul.mubr.f32.gmra.mrb[0].mxu0 %v266
        %v525 = vpop.f32.mrb[0].mxu0
        %v526 = vadd.f32 0.0, %v525
        %v527 = vpop.f32.mrb[0].mxu0
        %528 = vmatprep.mubr.f32.mxu0 %v271
        %529 = vmatmul.mubr.f32.gmra.mrb[0].mxu0 %v270
        %v530 = vpop.f32.mrb[0].mxu0
        %v531 = vadd.f32 0.0, %v530
        %v532 = vpop.f32.mrb[0].mxu0
        %533 = vmatprep.mubr.f32.mxu0 %v275
        %534 = vmatmul.mubr.f32.gmra.mrb[0].mxu0 %v274
        %v535 = vpop.f32.mrb[0].mxu0
        %v536 = vadd.f32 0.0, %v535
        %v537 = vpop.f32.mrb[0].mxu0
        %538 = vmatprep.mubr.f32.mxu0 %v279
        %539 = vmatmul.mubr.f32.gmra.mrb[0].mxu0 %v278
        %v540 = vpop.f32.mrb[0].mxu0
        %v541 = vadd.f32 0.0, %v540
        %v542 = vpop.f32.mrb[0].mxu0
        %543 = vmatprep.mubr.f32.mxu0 %v283
        %544 = vmatmul.mubr.f32.gmra.mrb[0].mxu0 %v282
        %v545 = vpop.f32.mrb[0].mxu0
        %v546 = vadd.f32 0.0, %v545
        %v547 = vpop.f32.mrb[0].mxu0
        %548 = vmatprep.mubr.f32.mxu0 %v287
        %549 = vmatmul.mubr.f32.gmra.mrb[0].mxu0 %v286
        %v550 = vpop.f32.mrb[0].mxu0
        %v551 = vadd.f32 0.0, %v550
        %v552 = vpop.f32.mrb[0].mxu0
        %553 = vmatprep.mubr.f32.mxu0 %v291
        %554 = vmatmul.mubr.f32.gmra.mrb[0].mxu0 %v290
        %v555 = vpop.f32.mrb[0].mxu0
        %v556 = vadd.f32 0.0, %v555
        %v557 = vpop.f32.mrb[0].mxu0
        %558 = vmatprep.mubr.f32.mxu0 %v295
        %559 = vmatmul.mubr.f32.gmra.mrb[0].mxu0 %v294
        %v560 = vpop.f32.mrb[0].mxu0
        %v561 = vadd.f32 0.0, %v560
        %v562 = vpop.f32.mrb[0].mxu0
        %563 = vmatprep.mubr.f32.mxu0 %v299
        %564 = vmatmul.mubr.f32.gmra.mrb[0].mxu0 %v298
        %v565 = vpop.f32.mrb[0].mxu0
        %v566 = vadd.f32 0.0, %v565
        %v567 = vpop.f32.mrb[0].mxu0
        %568 = vmatprep.mubr.f32.mxu0 %v303
        %569 = vmatmul.mubr.f32.gmra.mrb[0].mxu0 %v302
        %v570 = vpop.f32.mrb[0].mxu0
        %v571 = vadd.f32 0.0, %v570
        %v572 = vpop.f32.mrb[0].mxu0
        %573 = vmatprep.mubr.f32.mxu0 %v307
        %574 = vmatmul.mubr.f32.gmra.mrb[0].mxu0 %v306
        %v575 = vpop.f32.mrb[0].mxu0
        %v576 = vadd.f32 0.0, %v575
        %v577 = vpop.f32.mrb[0].mxu0
        %578 = vmatprep.mubr.f32.mxu0 %v311
        %579 = vmatmul.mubr.f32.gmra.mrb[0].mxu0 %v310
        %v580 = vpop.f32.mrb[0].mxu0
        %v581 = vadd.f32 0.0, %v580
        %v582 = vpop.f32.mrb[0].mxu0
        %583 = vmatprep.mubr.f32.mxu0 %v315
        %584 = vmatmul.mubr.f32.gmra.mrb[0].mxu0 %v314
        %v585 = vpop.f32.mrb[0].mxu0
        %v586 = vadd.f32 0.0, %v585
        %v587 = vpop.f32.mrb[0].mxu0
        %588 = vmatprep.mubr.f32.mxu0 %v319
        %589 = vmatmul.mubr.f32.gmra.mrb[0].mxu0 %v318
        %v590 = vpop.f32.mrb[0].mxu0
        %v591 = vadd.f32 0.0, %v590
        %v592 = vpop.f32.mrb[0].mxu0
        %593 = vmatprep.mubr.f32.mxu0 %v323
        %594 = vmatmul.mubr.f32.gmra.mrb[0].mxu0 %v322
        %v595 = vpop.f32.mrb[0].mxu0
        %v596 = vadd.f32 0.0, %v595
        %v597 = vpop.f32.mrb[0].mxu0
        %598 = vmatprep.mubr.f32.mxu0 %v327
        %599 = vmatmul.mubr.f32.gmra.mrb[0].mxu0 %v326
        %v600 = vpop.f32.mrb[0].mxu0
        %v601 = vadd.f32 0.0, %v600
        %v602 = vpop.f32.mrb[0].mxu0
        %603 = vmatprep.mubr.f32.mxu0 %v331
        %604 = vmatmul.mubr.f32.gmra.mrb[0].mxu0 %v330
        %v605 = vpop.f32.mrb[0].mxu0
        %v606 = vadd.f32 0.0, %v605
        %v607 = vpop.f32.mrb[0].mxu0
        %608 = vmatprep.mubr.f32.mxu0 %v335
        %609 = vmatmul.mubr.f32.gmra.mrb[0].mxu0 %v334
        %v610 = vpop.f32.mrb[0].mxu0
        %v611 = vadd.f32 0.0, %v610
        %v612 = vpop.f32.mrb[0].mxu0
        %613 = vmatprep.mubr.f32.mxu0 %v339
        %614 = vmatmul.mubr.f32.gmra.mrb[0].mxu0 %v338
        %v615 = vpop.f32.mrb[0].mxu0
        %v616 = vadd.f32 0.0, %v615
        %v617 = vpop.f32.mrb[0].mxu0
        %618 = vmatprep.mubr.f32.mxu0 %v343
        %619 = vmatmul.mubr.f32.gmra.mrb[0].mxu0 %v342
        %v620 = vpop.f32.mrb[0].mxu0
        %v621 = vadd.f32 0.0, %v620
        %v622 = vpop.f32.mrb[0].mxu0
        %623 = vmatprep.mubr.f32.mxu0 %v347
        %624 = vmatmul.mubr.f32.gmra.mrb[0].mxu0 %v346
        %v625 = vpop.f32.mrb[0].mxu0
        %v626 = vadd.f32 0.0, %v625
        %v627 = vpop.f32.mrb[0].mxu0
        %628 = vmatprep.mubr.f32.mxu0 %v351
        %629 = vmatmul.mubr.f32.gmra.mrb[0].mxu0 %v350
        %v630 = vpop.f32.mrb[0].mxu0
        %v631 = vadd.f32 0.0, %v630
        %v632 = vpop.f32.mrb[0].mxu0
        %633 = vmatprep.mubr.f32.mxu0 %v355
        %634 = vmatmul.mubr.f32.gmra.mrb[0].mxu0 %v354
        %v635 = vpop.f32.mrb[0].mxu0
        %v636 = vadd.f32 0.0, %v635
        %v637 = vpop.f32.mrb[0].mxu0
        %638 = vmatprep.mubr.f32.mxu0 %v359
        %639 = vmatmul.mubr.f32.gmra.mrb[0].mxu0 %v358
        %v640 = vpop.f32.mrb[0].mxu0
        %v641 = vadd.f32 0.0, %v640
        %v642 = vpop.f32.mrb[0].mxu0
        %643 = vmatprep.mubr.f32.mxu0 %v363
        %644 = vmatmul.mubr.f32.gmra.mrb[0].mxu0 %v362
        %v645 = vpop.f32.mrb[0].mxu0
        %v646 = vadd.f32 0.0, %v645
        %v647 = vpop.f32.mrb[0].mxu0
        %648 = vmatprep.mubr.f32.mxu0 %v367
        %649 = vmatmul.mubr.f32.gmra.mrb[0].mxu0 %v366
        %v650 = vpop.f32.mrb[0].mxu0
        %v651 = vadd.f32 0.0, %v650
        %v652 = vpop.f32.mrb[0].mxu0
        %653 = vmatprep.mubr.f32.mxu0 %v371
        %654 = vmatmul.mubr.f32.gmra.mrb[0].mxu0 %v370
        %v655 = vpop.f32.mrb[0].mxu0
        %v656 = vadd.f32 0.0, %v655
        %v657 = vpop.f32.mrb[0].mxu0
        %658 = vmatprep.mubr.f32.mxu0 %v375
        %659 = vmatmul.mubr.f32.gmra.mrb[0].mxu0 %v374
        %v660 = vpop.f32.mrb[0].mxu0
        %v661 = vadd.f32 0.0, %v660
        %v662 = vpop.f32.mrb[0].mxu0
        %663 = vmatprep.mubr.f32.mxu0 %v379
        %664 = vmatmul.mubr.f32.gmra.mrb[0].mxu0 %v378
        %v665 = vpop.f32.mrb[0].mxu0
        %v666 = vadd.f32 0.0, %v665
        %v667 = vpop.f32.mrb[0].mxu0
        %668 = vmatprep.mubr.f32.mxu0 %v383
        %669 = vmatmul.mubr.f32.gmra.mrb[0].mxu0 %v382
        %v670 = vpop.f32.mrb[0].mxu0
        %v671 = vadd.f32 0.0, %v670
        %v672 = vpop.f32.mrb[0].mxu0
        %673 = vmatprep.mubr.f32.mxu0 %v387
        %674 = vmatmul.mubr.f32.gmra.mrb[0].mxu0 %v386
        %v675 = vpop.f32.mrb[0].mxu0
        %v676 = vadd.f32 0.0, %v675
        %v677 = vpop.f32.mrb[0].mxu0
        %678 = vmatprep.mubr.f32.mxu0 %v391
        %679 = vmatmul.mubr.f32.gmra.mrb[0].mxu0 %v390
        %v680 = vpop.f32.mrb[0].mxu0
        %v681 = vadd.f32 0.0, %v680
        %v682 = vpop.f32.mrb[0].mxu0
        %683 = vdwg.mxu0
        %684 = vmatprep.subr.mxu0 0.0
        %685 = vmatpush1.msra.mxu0 %v427
        %686 = vmatprep.subr.mxu0 0.0
        %687 = vmatpush1.msra.mxu0 %v428
        %688 = vmatprep.subr.mxu0 0.0
        %689 = vmatpush1.msra.mxu0 %v429
        %690 = vmatprep.subr.mxu0 0.0
        %691 = vmatpush1.msra.mxu0 %v430
        %692 = vmatprep.subr.mxu0 0.0
        %693 = vmatpush1.msra.mxu0 %v431
        %694 = vmatprep.subr.mxu0 0.0
        %695 = vmatpush1.msra.mxu0 %v432
        %696 = vmatprep.subr.mxu0 0.0
        %697 = vmatpush1.msra.mxu0 %v433
        %698 = vmatprep.subr.mxu0 0.0
        %699 = vmatpush1.msra.mxu0 %v434
        %700 = vmatprep.subr.mxu0 0.0
        %701 = vmatpush1.msra.mxu0 %v435
        %702 = vmatprep.subr.mxu0 0.0
        %703 = vmatpush1.msra.mxu0 %v436
        %704 = vmatprep.subr.mxu0 0.0
        %705 = vmatpush1.msra.mxu0 %v437
        %706 = vmatprep.subr.mxu0 0.0
        %707 = vmatpush1.msra.mxu0 %v438
        %708 = vmatprep.subr.mxu0 0.0
        %709 = vmatpush1.msra.mxu0 %v439
        %710 = vmatprep.subr.mxu0 0.0
        %711 = vmatpush1.msra.mxu0 %v440
        %712 = vmatprep.subr.mxu0 0.0
        %713 = vmatpush1.msra.mxu0 %v441
        %714 = vmatprep.subr.mxu0 0.0
        %715 = vmatpush1.msra.mxu0 %v442
        %716 = vmatprep.subr.mxu0 0.0
        %717 = vmatpush1.msra.mxu0 %v443
        %718 = vmatprep.subr.mxu0 0.0
        %719 = vmatpush1.msra.mxu0 %v444
        %720 = vmatprep.subr.mxu0 0.0
        %721 = vmatpush1.msra.mxu0 %v445
        %722 = vmatprep.subr.mxu0 0.0
        %723 = vmatpush1.msra.mxu0 %v446
        %724 = vmatprep.subr.mxu0 0.0
        %725 = vmatpush1.msra.mxu0 %v447
        %726 = vmatprep.subr.mxu0 0.0
        %727 = vmatpush1.msra.mxu0 %v448
        %728 = vmatprep.subr.mxu0 0.0
        %729 = vmatpush1.msra.mxu0 %v449
        %730 = vmatprep.subr.mxu0 0.0
        %731 = vmatpush1.msra.mxu0 %v450
        %732 = vmatprep.subr.mxu0 0.0
        %733 = vmatpush1.msra.mxu0 %v451
        %734 = vmatprep.subr.mxu0 0.0
        %735 = vmatpush1.msra.mxu0 %v452
        %736 = vmatprep.subr.mxu0 0.0
        %737 = vmatpush1.msra.mxu0 %v453
        %738 = vmatprep.subr.mxu0 0.0
        %739 = vmatpush1.msra.mxu0 %v454
        %740 = vmatprep.subr.mxu0 0.0
        %741 = vmatpush1.msra.mxu0 %v455
        %742 = vmatprep.subr.mxu0 0.0
        %743 = vmatpush1.msra.mxu0 %v456
        %744 = vmatprep.subr.mxu0 0.0
        %745 = vmatpush1.msra.mxu0 %v457
        %746 = vmatprep.subr.mxu0 0.0
        %747 = vmatpush1.msra.mxu0 %v458
        %748 = vmatprep.mubr.f32.mxu0 %v269
        %749 = vmatmul.mubr.f32.gmra.mrb[0].mxu0 %v268
        %v750 = vpop.f32.mrb[0].mxu0
        %v751 = vadd.f32 %v526, %v750
        %v752 = vpop.f32.mrb[0].mxu0
        %753 = vmatprep.mubr.f32.mxu0 %v273
        %754 = vmatmul.mubr.f32.gmra.mrb[0].mxu0 %v272
        %v755 = vpop.f32.mrb[0].mxu0
        %v756 = vadd.f32 %v531, %v755
        %v757 = vpop.f32.mrb[0].mxu0
        %758 = vmatprep.mubr.f32.mxu0 %v277
        %759 = vmatmul.mubr.f32.gmra.mrb[0].mxu0 %v276
        %v760 = vpop.f32.mrb[0].mxu0
        %v761 = vadd.f32 %v536, %v760
        %v762 = vpop.f32.mrb[0].mxu0
        %763 = vmatprep.mubr.f32.mxu0 %v281
        %764 = vmatmul.mubr.f32.gmra.mrb[0].mxu0 %v280
        %v765 = vpop.f32.mrb[0].mxu0
        %v766 = vadd.f32 %v541, %v765
        %v767 = vpop.f32.mrb[0].mxu0
        %768 = vmatprep.mubr.f32.mxu0 %v285
        %769 = vmatmul.mubr.f32.gmra.mrb[0].mxu0 %v284
        %v770 = vpop.f32.mrb[0].mxu0
        %v771 = vadd.f32 %v546, %v770
        %v772 = vpop.f32.mrb[0].mxu0
        %773 = vmatprep.mubr.f32.mxu0 %v289
        %774 = vmatmul.mubr.f32.gmra.mrb[0].mxu0 %v288
        %v775 = vpop.f32.mrb[0].mxu0
        %v776 = vadd.f32 %v551, %v775
        %v777 = vpop.f32.mrb[0].mxu0
        %778 = vmatprep.mubr.f32.mxu0 %v293
        %779 = vmatmul.mubr.f32.gmra.mrb[0].mxu0 %v292
        %v780 = vpop.f32.mrb[0].mxu0
        %v781 = vadd.f32 %v556, %v780
        %v782 = vpop.f32.mrb[0].mxu0
        %783 = vmatprep.mubr.f32.mxu0 %v297
        %784 = vmatmul.mubr.f32.gmra.mrb[0].mxu0 %v296
        %v785 = vpop.f32.mrb[0].mxu0
        %v786 = vadd.f32 %v561, %v785
        %v787 = vpop.f32.mrb[0].mxu0
        %788 = vmatprep.mubr.f32.mxu0 %v301
        %789 = vmatmul.mubr.f32.gmra.mrb[0].mxu0 %v300
        %v790 = vpop.f32.mrb[0].mxu0
        %v791 = vadd.f32 %v566, %v790
        %v792 = vpop.f32.mrb[0].mxu0
        %793 = vmatprep.mubr.f32.mxu0 %v305
        %794 = vmatmul.mubr.f32.gmra.mrb[0].mxu0 %v304
        %v795 = vpop.f32.mrb[0].mxu0
        %v796 = vadd.f32 %v571, %v795
        %v797 = vpop.f32.mrb[0].mxu0
        %798 = vmatprep.mubr.f32.mxu0 %v309
        %799 = vmatmul.mubr.f32.gmra.mrb[0].mxu0 %v308
        %v800 = vpop.f32.mrb[0].mxu0
        %v801 = vadd.f32 %v576, %v800
        %v802 = vpop.f32.mrb[0].mxu0
        %803 = vmatprep.mubr.f32.mxu0 %v313
        %804 = vmatmul.mubr.f32.gmra.mrb[0].mxu0 %v312
        %v805 = vpop.f32.mrb[0].mxu0
        %v806 = vadd.f32 %v581, %v805
        %v807 = vpop.f32.mrb[0].mxu0
        %808 = vmatprep.mubr.f32.mxu0 %v317
        %809 = vmatmul.mubr.f32.gmra.mrb[0].mxu0 %v316
        %v810 = vpop.f32.mrb[0].mxu0
        %v811 = vadd.f32 %v586, %v810
        %v812 = vpop.f32.mrb[0].mxu0
        %813 = vmatprep.mubr.f32.mxu0 %v321
        %814 = vmatmul.mubr.f32.gmra.mrb[0].mxu0 %v320
        %v815 = vpop.f32.mrb[0].mxu0
        %v816 = vadd.f32 %v591, %v815
        %v817 = vpop.f32.mrb[0].mxu0
        %818 = vmatprep.mubr.f32.mxu0 %v325
        %819 = vmatmul.mubr.f32.gmra.mrb[0].mxu0 %v324
        %v820 = vpop.f32.mrb[0].mxu0
        %v821 = vadd.f32 %v596, %v820
        %v822 = vpop.f32.mrb[0].mxu0
        %823 = vmatprep.mubr.f32.mxu0 %v329
        %824 = vmatmul.mubr.f32.gmra.mrb[0].mxu0 %v328
        %v825 = vpop.f32.mrb[0].mxu0
        %v826 = vadd.f32 %v601, %v825
        %v827 = vpop.f32.mrb[0].mxu0
        %828 = vmatprep.mubr.f32.mxu0 %v333
        %829 = vmatmul.mubr.f32.gmra.mrb[0].mxu0 %v332
        %v830 = vpop.f32.mrb[0].mxu0
        %v831 = vadd.f32 %v606, %v830
        %v832 = vpop.f32.mrb[0].mxu0
        %833 = vmatprep.mubr.f32.mxu0 %v337
        %834 = vmatmul.mubr.f32.gmra.mrb[0].mxu0 %v336
        %v835 = vpop.f32.mrb[0].mxu0
        %v836 = vadd.f32 %v611, %v835
        %v837 = vpop.f32.mrb[0].mxu0
        %838 = vmatprep.mubr.f32.mxu0 %v341
        %839 = vmatmul.mubr.f32.gmra.mrb[0].mxu0 %v340
        %v840 = vpop.f32.mrb[0].mxu0
        %v841 = vadd.f32 %v616, %v840
        %v842 = vpop.f32.mrb[0].mxu0
        %843 = vmatprep.mubr.f32.mxu0 %v345
        %844 = vmatmul.mubr.f32.gmra.mrb[0].mxu0 %v344
        %v845 = vpop.f32.mrb[0].mxu0
        %v846 = vadd.f32 %v621, %v845
        %v847 = vpop.f32.mrb[0].mxu0
        %848 = vmatprep.mubr.f32.mxu0 %v349
        %849 = vmatmul.mubr.f32.gmra.mrb[0].mxu0 %v348
        %v850 = vpop.f32.mrb[0].mxu0
        %v851 = vadd.f32 %v626, %v850
        %v852 = vpop.f32.mrb[0].mxu0
        %853 = vmatprep.mubr.f32.mxu0 %v353
        %854 = vmatmul.mubr.f32.gmra.mrb[0].mxu0 %v352
        %v855 = vpop.f32.mrb[0].mxu0
        %v856 = vadd.f32 %v631, %v855
        %v857 = vpop.f32.mrb[0].mxu0
        %858 = vmatprep.mubr.f32.mxu0 %v357
        %859 = vmatmul.mubr.f32.gmra.mrb[0].mxu0 %v356
        %v860 = vpop.f32.mrb[0].mxu0
        %v861 = vadd.f32 %v636, %v860
        %v862 = vpop.f32.mrb[0].mxu0
        %863 = vmatprep.mubr.f32.mxu0 %v361
        %864 = vmatmul.mubr.f32.gmra.mrb[0].mxu0 %v360
        %v865 = vpop.f32.mrb[0].mxu0
        %v866 = vadd.f32 %v641, %v865
        %v867 = vpop.f32.mrb[0].mxu0
        %868 = vmatprep.mubr.f32.mxu0 %v365
        %869 = vmatmul.mubr.f32.gmra.mrb[0].mxu0 %v364
        %v870 = vpop.f32.mrb[0].mxu0
        %v871 = vadd.f32 %v646, %v870
        %v872 = vpop.f32.mrb[0].mxu0
        %873 = vmatprep.mubr.f32.mxu0 %v369
        %874 = vmatmul.mubr.f32.gmra.mrb[0].mxu0 %v368
        %v875 = vpop.f32.mrb[0].mxu0
        %v876 = vadd.f32 %v651, %v875
        %v877 = vpop.f32.mrb[0].mxu0
        %878 = vmatprep.mubr.f32.mxu0 %v373
        %879 = vmatmul.mubr.f32.gmra.mrb[0].mxu0 %v372
        %v880 = vpop.f32.mrb[0].mxu0
        %v881 = vadd.f32 %v656, %v880
        %v882 = vpop.f32.mrb[0].mxu0
        %883 = vmatprep.mubr.f32.mxu0 %v377
        %884 = vmatmul.mubr.f32.gmra.mrb[0].mxu0 %v376
        %v885 = vpop.f32.mrb[0].mxu0
        %v886 = vadd.f32 %v661, %v885
        %v887 = vpop.f32.mrb[0].mxu0
        %888 = vmatprep.mubr.f32.mxu0 %v381
        %889 = vmatmul.mubr.f32.gmra.mrb[0].mxu0 %v380
        %v890 = vpop.f32.mrb[0].mxu0
        %v891 = vadd.f32 %v666, %v890
        %v892 = vpop.f32.mrb[0].mxu0
        %893 = vmatprep.mubr.f32.mxu0 %v385
        %894 = vmatmul.mubr.f32.gmra.mrb[0].mxu0 %v384
        %v895 = vpop.f32.mrb[0].mxu0
        %v896 = vadd.f32 %v671, %v895
        %v897 = vpop.f32.mrb[0].mxu0
        %898 = vmatprep.mubr.f32.mxu0 %v389
        %899 = vmatmul.mubr.f32.gmra.mrb[0].mxu0 %v388
        %v900 = vpop.f32.mrb[0].mxu0
        %v901 = vadd.f32 %v676, %v900
        %v902 = vpop.f32.mrb[0].mxu0
        %903 = vmatprep.mubr.f32.mxu0 %v393
        %904 = vmatmul.mubr.f32.gmra.mrb[0].mxu0 %v392
        %v905 = vpop.f32.mrb[0].mxu0
        %v906 = vadd.f32 %v681, %v905
        %v907 = vpop.f32.mrb[0].mxu0
        %908 = vdwg.mxu0
        %v909 = vadd.f32 %v234, %v751
        %v910 = vadd.f32 %v235, %v756
        %v911 = vadd.f32 %v236, %v761
        %v912 = vadd.f32 %v237, %v766
        %v913 = vadd.f32 %v238, %v771
        %v914 = vadd.f32 %v239, %v776
        %v915 = vadd.f32 %v240, %v781
        %v916 = vadd.f32 %v241, %v786
        %v917 = vadd.f32 %v242, %v791
        %v918 = vadd.f32 %v243, %v796
        %v919 = vadd.f32 %v244, %v801
        %v920 = vadd.f32 %v245, %v806
        %v921 = vadd.f32 %v246, %v811
        %v922 = vadd.f32 %v247, %v816
        %v923 = vadd.f32 %v248, %v821
        %v924 = vadd.f32 %v249, %v826
        %v925 = vadd.f32 %v250, %v831
        %v926 = vadd.f32 %v251, %v836
        %v927 = vadd.f32 %v252, %v841
        %v928 = vadd.f32 %v253, %v846
        %v929 = vadd.f32 %v254, %v851
        %v930 = vadd.f32 %v255, %v856
        %v931 = vadd.f32 %v256, %v861
        %v932 = vadd.f32 %v257, %v866
        %v933 = vadd.f32 %v258, %v871
        %v934 = vadd.f32 %v259, %v876
        %v935 = vadd.f32 %v260, %v881
        %v936 = vadd.f32 %v261, %v886
        %v937 = vadd.f32 %v262, %v891
        %v938 = vadd.f32 %v263, %v896
        %v939 = vadd.f32 %v264, %v901
        %v940 = vadd.f32 %v265, %v906
        %941 = vst [vmem:[#allocation2] sm:$0xff] %v909
        %942 = vst [vmem:[#allocation2 + $0x8] sm:$0xff] %v910
        %943 = vst [vmem:[#allocation2 + $0x10] sm:$0xff] %v911
        %944 = vst [vmem:[#allocation2 + $0x18] sm:$0xff] %v912
        %945 = vst [vmem:[#allocation2 + $0x20] sm:$0xff] %v913
        %946 = vst [vmem:[#allocation2 + $0x28] sm:$0xff] %v914
        %947 = vst [vmem:[#allocation2 + $0x30] sm:$0xff] %v915
        %948 = vst [vmem:[#allocation2 + $0x38] sm:$0xff] %v916
        %949 = vst [vmem:[#allocation2 + $0x40] sm:$0xff] %v917
        %950 = vst [vmem:[#allocation2 + $0x48] sm:$0xff] %v918
        %951 = vst [vmem:[#allocation2 + $0x50] sm:$0xff] %v919
        %952 = vst [vmem:[#allocation2 + $0x58] sm:$0xff] %v920
        %953 = vst [vmem:[#allocation2 + $0x60] sm:$0xff] %v921
        %954 = vst [vmem:[#allocation2 + $0x68] sm:$0xff] %v922
        %955 = vst [vmem:[#allocation2 + $0x70] sm:$0xff] %v923
        %956 = vst [vmem:[#allocation2 + $0x78] sm:$0xff] %v924
        %957 = vst [vmem:[#allocation2 + $0x80] sm:$0xff] %v925
        %958 = vst [vmem:[#allocation2 + $0x88] sm:$0xff] %v926
        %959 = vst [vmem:[#allocation2 + $0x90] sm:$0xff] %v927
        %960 = vst [vmem:[#allocation2 + $0x98] sm:$0xff] %v928
        %961 = vst [vmem:[#allocation2 + $0xa0] sm:$0xff] %v929
        %962 = vst [vmem:[#allocation2 + $0xa8] sm:$0xff] %v930
        %963 = vst [vmem:[#allocation2 + $0xb0] sm:$0xff] %v931
        %964 = vst [vmem:[#allocation2 + $0xb8] sm:$0xff] %v932
        %965 = vst [vmem:[#allocation2 + $0xc0] sm:$0xff] %v933
        %966 = vst [vmem:[#allocation2 + $0xc8] sm:$0xff] %v934
        %967 = vst [vmem:[#allocation2 + $0xd0] sm:$0xff] %v935
        %968 = vst [vmem:[#allocation2 + $0xd8] sm:$0xff] %v936
        %969 = vst [vmem:[#allocation2 + $0xe0] sm:$0xff] %v937
        %970 = vst [vmem:[#allocation2 + $0xe8] sm:$0xff] %v938
        %971 = vst [vmem:[#allocation2 + $0xf0] sm:$0xff] %v939
        %972 = vst [vmem:[#allocation2 + $0xf8] sm:$0xff] %v940
        %p973 = scmp.eq.s32.totalorder %s25, 1
        // Predicated region
        $region41: #{tpu_custom_call.1} parent=27 // pred_check
          %p974 = pneg %p973
        $region42: #{tpu_custom_call.1} parent=27 // pred_check_branch
          %976 = sbr.rel (%p974) target = $region44
        $region43: #{tpu_custom_call.1} parent=27 // pred_region
          %v977 = vld [vmem:[#allocation2] sm:$0xff]
          %v978 = vld [vmem:[#allocation2 + $0x8] sm:$0xff]
          %v979 = vld [vmem:[#allocation2 + $0x10] sm:$0xff]
          %v980 = vld [vmem:[#allocation2 + $0x18] sm:$0xff]
          %v981 = vld [vmem:[#allocation2 + $0x20] sm:$0xff]
          %v982 = vld [vmem:[#allocation2 + $0x28] sm:$0xff]
          %v983 = vld [vmem:[#allocation2 + $0x30] sm:$0xff]
          %v984 = vld [vmem:[#allocation2 + $0x38] sm:$0xff]
          %v985 = vld [vmem:[#allocation2 + $0x40] sm:$0xff]
          %v986 = vld [vmem:[#allocation2 + $0x48] sm:$0xff]
          %v987 = vld [vmem:[#allocation2 + $0x50] sm:$0xff]
          %v988 = vld [vmem:[#allocation2 + $0x58] sm:$0xff]
          %v989 = vld [vmem:[#allocation2 + $0x60] sm:$0xff]
          %v990 = vld [vmem:[#allocation2 + $0x68] sm:$0xff]
          %v991 = vld [vmem:[#allocation2 + $0x70] sm:$0xff]
          %v992 = vld [vmem:[#allocation2 + $0x78] sm:$0xff]
          %v993 = vld [vmem:[#allocation2 + $0x80] sm:$0xff]
          %v994 = vld [vmem:[#allocation2 + $0x88] sm:$0xff]
          %v995 = vld [vmem:[#allocation2 + $0x90] sm:$0xff]
          %v996 = vld [vmem:[#allocation2 + $0x98] sm:$0xff]
          %v997 = vld [vmem:[#allocation2 + $0xa0] sm:$0xff]
          %v998 = vld [vmem:[#allocation2 + $0xa8] sm:$0xff]
          %v999 = vld [vmem:[#allocation2 + $0xb0] sm:$0xff]
          %v1000 = vld [vmem:[#allocation2 + $0xb8] sm:$0xff]
          %v1001 = vld [vmem:[#allocation2 + $0xc0] sm:$0xff]
          %v1002 = vld [vmem:[#allocation2 + $0xc8] sm:$0xff]
          %v1003 = vld [vmem:[#allocation2 + $0xd0] sm:$0xff]
          %v1004 = vld [vmem:[#allocation2 + $0xd8] sm:$0xff]
          %v1005 = vld [vmem:[#allocation2 + $0xe0] sm:$0xff]
          %v1006 = vld [vmem:[#allocation2 + $0xe8] sm:$0xff]
          %v1007 = vld [vmem:[#allocation2 + $0xf0] sm:$0xff]
          %v1008 = vld [vmem:[#allocation2 + $0xf8] sm:$0xff]
          %v1009 = vmax.f32 %v977, 0.0
          %v1010 = vmax.f32 %v978, 0.0
          %v1011 = vmax.f32 %v979, 0.0
          %v1012 = vmax.f32 %v980, 0.0
          %v1013 = vmax.f32 %v981, 0.0
          %v1014 = vmax.f32 %v982, 0.0
          %v1015 = vmax.f32 %v983, 0.0
          %v1016 = vmax.f32 %v984, 0.0
          %v1017 = vmax.f32 %v985, 0.0
          %v1018 = vmax.f32 %v986, 0.0
          %v1019 = vmax.f32 %v987, 0.0
          %v1020 = vmax.f32 %v988, 0.0
          %v1021 = vmax.f32 %v989, 0.0
          %v1022 = vmax.f32 %v990, 0.0
          %v1023 = vmax.f32 %v991, 0.0
          %v1024 = vmax.f32 %v992, 0.0
          %v1025 = vmax.f32 %v993, 0.0
          %v1026 = vmax.f32 %v994, 0.0
          %v1027 = vmax.f32 %v995, 0.0
          %v1028 = vmax.f32 %v996, 0.0
          %v1029 = vmax.f32 %v997, 0.0
          %v1030 = vmax.f32 %v998, 0.0
          %v1031 = vmax.f32 %v999, 0.0
          %v1032 = vmax.f32 %v1000, 0.0
          %v1033 = vmax.f32 %v1001, 0.0
          %v1034 = vmax.f32 %v1002, 0.0
          %v1035 = vmax.f32 %v1003, 0.0
          %v1036 = vmax.f32 %v1004, 0.0
          %v1037 = vmax.f32 %v1005, 0.0
          %v1038 = vmax.f32 %v1006, 0.0
          %v1039 = vmax.f32 %v1007, 0.0
          %v1040 = vmax.f32 %v1008, 0.0
          %1041 = vst [vmem:[%s193] sm:$0xff] %v1009
          %1042 = vst [vmem:[%s193 + $0x8] sm:$0xff] %v1010
          %1043 = vst [vmem:[%s193 + $0x10] sm:$0xff] %v1011
          %1044 = vst [vmem:[%s193 + $0x18] sm:$0xff] %v1012
          %1045 = vst [vmem:[%s193 + $0x20] sm:$0xff] %v1013
          %1046 = vst [vmem:[%s193 + $0x28] sm:$0xff] %v1014
          %1047 = vst [vmem:[%s193 + $0x30] sm:$0xff] %v1015
          %1048 = vst [vmem:[%s193 + $0x38] sm:$0xff] %v1016
          %1049 = vst [vmem:[%s193 + $0x40] sm:$0xff] %v1017
          %1050 = vst [vmem:[%s193 + $0x48] sm:$0xff] %v1018
          %1051 = vst [vmem:[%s193 + $0x50] sm:$0xff] %v1019
          %1052 = vst [vmem:[%s193 + $0x58] sm:$0xff] %v1020
          %1053 = vst [vmem:[%s193 + $0x60] sm:$0xff] %v1021
          %1054 = vst [vmem:[%s193 + $0x68] sm:$0xff] %v1022
          %1055 = vst [vmem:[%s193 + $0x70] sm:$0xff] %v1023
          %1056 = vst [vmem:[%s193 + $0x78] sm:$0xff] %v1024
          %1057 = vst [vmem:[%s193 + $0x80] sm:$0xff] %v1025
          %1058 = vst [vmem:[%s193 + $0x88] sm:$0xff] %v1026
          %1059 = vst [vmem:[%s193 + $0x90] sm:$0xff] %v1027
          %1060 = vst [vmem:[%s193 + $0x98] sm:$0xff] %v1028
          %1061 = vst [vmem:[%s193 + $0xa0] sm:$0xff] %v1029
          %1062 = vst [vmem:[%s193 + $0xa8] sm:$0xff] %v1030
          %1063 = vst [vmem:[%s193 + $0xb0] sm:$0xff] %v1031
          %1064 = vst [vmem:[%s193 + $0xb8] sm:$0xff] %v1032
          %1065 = vst [vmem:[%s193 + $0xc0] sm:$0xff] %v1033
          %1066 = vst [vmem:[%s193 + $0xc8] sm:$0xff] %v1034
          %1067 = vst [vmem:[%s193 + $0xd0] sm:$0xff] %v1035
          %1068 = vst [vmem:[%s193 + $0xd8] sm:$0xff] %v1036
          %1069 = vst [vmem:[%s193 + $0xe0] sm:$0xff] %v1037
          %1070 = vst [vmem:[%s193 + $0xe8] sm:$0xff] %v1038
          %1071 = vst [vmem:[%s193 + $0xf0] sm:$0xff] %v1039
          %1072 = vst [vmem:[%s193 + $0xf8] sm:$0xff] %v1040
        $region44: #{tpu_custom_call.1} parent=27 // pred_fallthru
          _
        %s1073 = sand.u32 %s89, 1
        %s1074 = scalar_lea.sflag [#allocation5], %s1073
        %s1075 = sand.u32 %s89, 1
        %s1076 = smul.addr %s1075, 256
        %s1077 = scalar_lea.vmem [#allocation8], %s1076
        // Predicated region
        $region45: #{tpu_custom_call.1} parent=27 // pred_check
          %p1078 = pneg %p99
        $region46: #{tpu_custom_call.1} parent=27 // pred_check_branch
          %1080 = sbr.rel (%p1078) target = $region48
        $region47: #{tpu_custom_call.1} parent=27 // pred_region
          %s1081 = smul.u32 32, %s24
          %s1083 = ssub.s32 4096, 4096
          %1084 = vsyncadd %s1074, %s1083
          %s1085 = smul.addr %s1081, 128
          %s1086 = scalar_lea.hbm %s2, %s1085
          %s1087 = sshll.u32 %s1077, 4
          %s1088 = int_to_ptr.vmem [resolvable:$true] %s1087
          %1093 = dma.vmem_to_hbm [thread:$0]  %s1088, 4096, %s1086, %s1074, 128, 128, 8
        $region48: #{tpu_custom_call.1} parent=27 // pred_fallthru
          _
      $region28: #{tpu_custom_call.1} parent=5 // pred_fallthru
        _
      %p1094 = scmp.le.s32.totalorder 2, %s15
      // Predicated region
      $region49: #{tpu_custom_call.1} parent=5 // pred_check
        %p1095 = pneg %p1094
      $region50: #{tpu_custom_call.1} parent=5 // pred_check_branch
        %1097 = sbr.rel (%p1095) target = $region52
      $region51: #{tpu_custom_call.1} parent=5 // pred_region
        %s1098 = ssub.s32 %s15, 2
        // Predicated region
        $region53: #{tpu_custom_call.1} parent=51 // pred_check
          %p1099 = pneg %p105
        $region54: #{tpu_custom_call.1} parent=51 // pred_check_branch
          %1101 = sbr.rel (%p1099) target = $region56
        $region55: #{tpu_custom_call.1} parent=51 // pred_region
          %s1102 = sand.u32 %s90, 1
          %s1103 = scalar_lea.sflag [#allocation5], %s1102
          %s1104 = sand.u32 %s90, 1
          %s1105 = smul.addr %s1104, 256
          %s1106 = scalar_lea.vmem [#allocation8], %s1105
          %1107 = dma.done %s1103, 4096
        $region56: #{tpu_custom_call.1} parent=51 // pred_fallthru
          _
      $region52: #{tpu_custom_call.1} parent=5 // pred_fallthru
        _
    $region6: #{tpu_custom_call.1} parent=1 // loop_footer
      %s19 = sadd.s32 1, %s15
    $region7: #{tpu_custom_call.1} parent=1 // loop_footer_branch
      %14 = sbr.rel target = $region3
    $region8: #{tpu_custom_call.1} parent=1 // loop_exit
      _
    %1108 = vsyncpa [#allocation4], 1
    %s1109 = scalar_lea.sflag [#allocation4], 1
    %1110 = vsyncpa %s1109, 1
    %1111 = vsyncpa [#allocation7], 1
    %1112 = vsyncpa [#allocation5], 1
    %s1113 = scalar_lea.sflag [#allocation5], 1
    %1114 = vsyncpa %s1113, 1

</llo_original>
